<compile_context>
chip_gen: v6e
topology: v6e:2x2x1
jax: 0.10.0
libtpu: 0.0.40
codegen_flags: <defaults>
</compile_context>

<pallas_src>
import functools
import numpy as np
import jax
import jax.numpy as jnp
from jax import lax
from jax.experimental import pallas as pl
from jax.experimental.pallas import tpu as pltpu


def _bilinear_matrix(in_size, out_size):
    """Interpolation matrix A (out_size, in_size) for align_corners=True bilinear resize."""
    if out_size == 1 or in_size == 1:
        src = np.zeros((out_size,), np.float64)
    else:
        src = np.arange(out_size, dtype=np.float64) * (in_size - 1) / (out_size - 1)
    i0 = np.clip(np.floor(src).astype(np.int64), 0, in_size - 1)
    i1 = np.minimum(i0 + 1, in_size - 1)
    frac = src - i0
    A = np.zeros((out_size, in_size), np.float64)
    A[np.arange(out_size), i0] += (1.0 - frac)
    A[np.arange(out_size), i1] += frac
    return A.astype(np.float32)


def upsampling_kernel(x_ref, ahs_ref, bcat_ref, bias_ref, o_ref, *, TN, C, K, HO, CW, COWP):
    # x_ref:    (TN, C, H, W)    raw NCHW input block (no wrapper transpose)
    # ahs_ref:  (K*HO, H)        bf16: K vertically-shifted row-interp matrices, stacked on rows
    # bcat_ref: (K*CW, COWP)     bf16: col-interp + conv weights + BN scale, dy blocks stacked on rows
    # bias_ref: (1, COWP)        f32: conv bias + BN bias per output lane
    # o_ref:    (TN, HO, COWP)   lane-dense output slab
    ahs = ahs_ref[...]                                                   # (K*HO, H) bf16

    rows = []
    for n in range(TN):                                                  # static, TN small
        # Channel fold (C, H, W) -> (H, C*W): lane concat (XLU slot), avoids an HBM transpose pass.
        x2n = jnp.concatenate([x_ref[n, c] for c in range(C)], axis=-1)  # (H, CW) f32
        # Stage 1: row interpolation for all K vertical shifts (one MXU matmul per sample).
        t = jnp.dot(ahs, x2n.astype(jnp.bfloat16),
                    preferred_element_type=jnp.float32)                  # (K*HO, CW) f32
        # K-fold: lane-concat the K dy row-blocks -> (HO, K*CW); contraction becomes K*CW (=128 here).
        rows.append(jnp.concatenate(
            [t[dy * HO:(dy + 1) * HO, :] for dy in range(K)], axis=-1))  # (HO, K*CW)
    l = rows[0] if TN == 1 else jnp.concatenate(rows, axis=0)            # (TN*HO, K*CW) f32

    # Stage 2: ONE matmul with N folded onto M — col interp + KxK conv + channel mix + BN scale.
    acc = jnp.dot(l.astype(jnp.bfloat16), bcat_ref[...],
                  preferred_element_type=jnp.float32)                    # (TN*HO, COWP) f32
    out = acc + bias_ref[...]                                            # f32 epilogue

    for n in range(TN):                                                  # static, sublane-aligned slices
        o_ref[n] = out[n * HO:(n + 1) * HO, :].astype(o_ref.dtype)


def upsampling_forward(x, conv_w, conv_b, bn_gamma, bn_beta, bn_mean, bn_var,
                       pool_size=2, eps=1e-5):
    N, C, H, W = x.shape
    K = pool_size
    HO, WO = H * K, W * K
    COUT = conv_w.shape[0]
    CW = C * W
    COW = COUT * WO
    COWP = ((COW + 127) // 128) * 128        # lane-dense output slab (unmasked vst)
    pad_lo = (K - 1) // 2                    # PyTorch padding='same': left/top = (K-1)//2

    # Batch TN samples per grid step (amortize per-step overhead, grow matmul M / DMA size)
    # while keeping >= 2 parallel grid steps so v7x's 2 TensorCores both get work.
    TN = 1
    for cand in (8, 4, 2):
        if N % cand == 0 and N // cand >= 2:
            TN = cand
            break

    # --- host precompute: shifted align_corners=True interpolation matrices ---
    ah = _bilinear_matrix(H, HO)                          # (HO, H)
    aw = _bilinear_matrix(W, WO)                          # (WO, W)
    ahs = np.zeros((K, HO, H), np.float32)
    aws = np.zeros((K, WO, W), np.float32)
    for d in range(K):
        for i in range(HO):
            s = i + d - pad_lo
            if 0 <= s < HO:
                ahs[d, i] = ah[s]
        for j in range(WO):
            s = j + d - pad_lo
            if 0 <= s < WO:                               # FIXED: bound is WO (was HO)
                aws[d, j] = aw[s]
    ahs_op = jnp.asarray(ahs.reshape(K * HO, H)).astype(jnp.bfloat16)    # (K*HO, H)

    # --- fold conv bias + eval-mode BN into per-channel scale/bias ---
    scale = bn_gamma / jnp.sqrt(bn_var + eps)             # (COUT,)
    bias = bn_beta + (conv_b - bn_mean) * scale           # (COUT,)

    # --- fold BN scale, conv weights, horizontal shifts, channel mix into B_cat ---
    # B_cat[dy*C*W + c*W + w, d*WO + j] = sum_dx scale[d] * conv_w[d, c, dy, dx] * aws[dx, j, w]
    w_scaled = conv_w.astype(jnp.float32) * scale[:, None, None, None]   # (COUT, C, K, K)
    b_mat = jnp.einsum('dcyx,xjw->ycwdj', w_scaled, jnp.asarray(aws))    # (K, C, W, COUT, WO)
    b_cat = b_mat.reshape(K * CW, COW)
    bias_row = jnp.broadcast_to(bias[:, None], (COUT, WO)).reshape(1, COW).astype(jnp.float32)
    if COWP != COW:                                       # pad output lanes to a multiple of 128
        b_cat = jnp.pad(b_cat, ((0, 0), (0, COWP - COW)))
        bias_row = jnp.pad(bias_row, ((0, 0), (0, COWP - COW)))
    b_cat = b_cat.astype(jnp.bfloat16)

    kernel = functools.partial(upsampling_kernel,
                               TN=TN, C=C, K=K, HO=HO, CW=CW, COWP=COWP)

    out_slab = pl.pallas_call(
        kernel,
        out_shape=jax.ShapeDtypeStruct((N, HO, COWP), x.dtype),
        grid=(N // TN,),
        in_specs=[
            pl.BlockSpec((TN, C, H, W), lambda g: (g, 0, 0, 0)),   # raw NCHW input block
            pl.BlockSpec((K * HO, H), lambda g: (0, 0)),           # AhS (grid-invariant)
            pl.BlockSpec((K * CW, COWP), lambda g: (0, 0)),        # B_cat (grid-invariant)
            pl.BlockSpec((1, COWP), lambda g: (0, 0)),             # bias row (grid-invariant)
        ],
        out_specs=pl.BlockSpec((TN, HO, COWP), lambda g: (g, 0, 0)),
        compiler_params=pltpu.CompilerParams(dimension_semantics=("parallel",)),
    )(x, ahs_op, b_cat, bias_row)

    # Lane-dense slab -> NCHW (module contract).  A fused consumer should accept the slab
    # directly and skip this transpose.
    if COWP != COW:
        out_slab = out_slab[:, :, :COW]
    return jnp.transpose(out_slab.reshape(N, HO, COUT, WO), (0, 2, 1, 3))


def reference(x, conv_w, conv_b, gamma, beta, mean, var, pool_size=2, eps=1e-5):
    N, C, H, W = x.shape
    K = pool_size
    HO, WO = H * K, W * K
    ah = jnp.asarray(_bilinear_matrix(H, HO))
    aw = jnp.asarray(_bilinear_matrix(W, WO))
    up = jnp.einsum('oh,nchw,pw->ncop', ah, x, aw)
    pad_lo = (K - 1) // 2
    pad_hi = (K - 1) - pad_lo
    conv = lax.conv_general_dilated(
        up, conv_w, window_strides=(1, 1),
        padding=((pad_lo, pad_hi), (pad_lo, pad_hi)),
        dimension_numbers=('NCHW', 'OIHW', 'NCHW'))
    conv = conv + conv_b[None, :, None, None]
    scale = gamma / jnp.sqrt(var + eps)
    return (scale[None, :, None, None] * (conv - mean[None, :, None, None])
            + beta[None, :, None, None])


if __name__ == "__main__":
    key = jax.random.PRNGKey(0)
    k1, k2, k3, k4, k5 = jax.random.split(key, 5)

    N, C, H, W = 2, 4, 16, 16           # in_width = 4
    COUT, K = C, 2                      # width=None -> width=in_width; pool_size=2

    x = jax.random.normal(k1, (N, C, H, W), jnp.float32)
    conv_w = 0.25 * jax.random.normal(k2, (COUT, C, K, K), jnp.float32)
    conv_b = 0.10 * jax.random.normal(k3, (COUT,), jnp.float32)
    bn_gamma = 1.0 + 0.1 * jax.random.normal(k4, (COUT,), jnp.float32)
    bn_beta = 0.1 * jax.random.normal(k5, (COUT,), jnp.float32)
    bn_mean = jnp.zeros((COUT,), jnp.float32)   # freshly-initialized running stats
    bn_var = jnp.ones((COUT,), jnp.float32)

    out = upsampling_forward(x, conv_w, conv_b, bn_gamma, bn_beta, bn_mean, bn_var,
                             pool_size=K)
    out = jax.block_until_ready(out)

    ref = reference(x, conv_w, conv_b, bn_gamma, bn_beta, bn_mean, bn_var, pool_size=K)
    assert out.shape == (N, COUT, 2 * H, 2 * W), out.shape
    # bf16 MXU operands with f32 accumulation: ~1e-2 max abs error vs the f32 reference.
    np.testing.assert_allclose(np.asarray(out), np.asarray(ref), rtol=2e-2, atol=2e-2)
    print("KERNEL_OK")
</pallas_src>

<mosaic_0001>
module attributes {stable_mosaic.version = 11 : i64} {
  func.func @upsampling_kernel(%arg0: i32, %arg1: memref<1x4x16x16xf32, #tpu.memory_space<vmem>>, %arg2: memref<64x16xbf16, #tpu.memory_space<vmem>>, %arg3: memref<128x128xbf16, #tpu.memory_space<vmem>>, %arg4: memref<1x128xf32, #tpu.memory_space<vmem>>, %arg5: memref<1x32x128xf32, #tpu.memory_space<vmem>>) attributes {dimension_semantics = [#tpu.dimension_semantics<parallel>], iteration_bounds = array<i64: 2>, scalar_prefetch = 0 : i64, scratch_operands = 0 : i64, tpu.core_type = #tpu.core_type<tc>, window_params = [{transform_indices = @transform_0, window_bounds = array<i64: 1, 4, 16, 16>}, {pipeline_mode = #tpu.pipeline_mode<synchronous>, transform_indices = @transform_1, window_bounds = array<i64: 64, 16>}, {pipeline_mode = #tpu.pipeline_mode<synchronous>, transform_indices = @transform_2, window_bounds = array<i64: 128, 128>}, {pipeline_mode = #tpu.pipeline_mode<synchronous>, transform_indices = @transform_3, window_bounds = array<i64: 1, 128>}, {transform_indices = @transform_4, window_bounds = array<i64: 1, 32, 128>}]} {
    %c0 = arith.constant 0 : index
    %c0_0 = arith.constant 0 : index
    %0 = vector.load %arg2[%c0, %c0_0] : memref<64x16xbf16, #tpu.memory_space<vmem>>, vector<64x16xbf16>
    %c0_1 = arith.constant 0 : index
    %c0_2 = arith.constant 0 : index
    %c0_3 = arith.constant 0 : index
    %c0_4 = arith.constant 0 : index
    %1 = vector.load %arg1[%c0_1, %c0_2, %c0_3, %c0_4] : memref<1x4x16x16xf32, #tpu.memory_space<vmem>>, vector<1x1x16x16xf32>
    %2 = vector.shape_cast %1 : vector<1x1x16x16xf32> to vector<16x16xf32>
    %c0_5 = arith.constant 0 : index
    %c1 = arith.constant 1 : index
    %c0_6 = arith.constant 0 : index
    %c0_7 = arith.constant 0 : index
    %3 = vector.load %arg1[%c0_5, %c1, %c0_6, %c0_7] : memref<1x4x16x16xf32, #tpu.memory_space<vmem>>, vector<1x1x16x16xf32>
    %4 = vector.shape_cast %3 : vector<1x1x16x16xf32> to vector<16x16xf32>
    %c0_8 = arith.constant 0 : index
    %c2 = arith.constant 2 : index
    %c0_9 = arith.constant 0 : index
    %c0_10 = arith.constant 0 : index
    %5 = vector.load %arg1[%c0_8, %c2, %c0_9, %c0_10] : memref<1x4x16x16xf32, #tpu.memory_space<vmem>>, vector<1x1x16x16xf32>
    %6 = vector.shape_cast %5 : vector<1x1x16x16xf32> to vector<16x16xf32>
    %c0_11 = arith.constant 0 : index
    %c3 = arith.constant 3 : index
    %c0_12 = arith.constant 0 : index
    %c0_13 = arith.constant 0 : index
    %7 = vector.load %arg1[%c0_11, %c3, %c0_12, %c0_13] : memref<1x4x16x16xf32, #tpu.memory_space<vmem>>, vector<1x1x16x16xf32>
    %8 = vector.shape_cast %7 : vector<1x1x16x16xf32> to vector<16x16xf32>
    %9 = tpu.concatenate %2, %4, %6, %8 in 1 : vector<16x16xf32>, vector<16x16xf32>, vector<16x16xf32>, vector<16x16xf32> -> vector<16x64xf32>
    %10 = arith.truncf %9 : vector<16x64xf32> to vector<16x64xbf16>
    %cst = arith.constant dense<0.000000e+00> : vector<64x64xf32>
    %11 = tpu.matmul %0, %10, %cst {dimension_numbers = #tpu.dot_dimension_numbers<[1], [0], [0], [1], [0, 0, 1, 1], [], []>} : vector<64x16xbf16>, vector<16x64xbf16>, vector<64x64xf32> -> vector<64x64xf32>
    %12 = vector.extract_strided_slice %11 {offsets = [0, 0], sizes = [32, 64], strides = [1, 1]} : vector<64x64xf32> to vector<32x64xf32>
    %13 = vector.extract_strided_slice %11 {offsets = [32, 0], sizes = [32, 64], strides = [1, 1]} : vector<64x64xf32> to vector<32x64xf32>
    %14 = tpu.concatenate %12, %13 in 1 : vector<32x64xf32>, vector<32x64xf32> -> vector<32x128xf32>
    %15 = arith.truncf %14 : vector<32x128xf32> to vector<32x128xbf16>
    %c0_14 = arith.constant 0 : index
    %c0_15 = arith.constant 0 : index
    %16 = vector.load %arg3[%c0_14, %c0_15] : memref<128x128xbf16, #tpu.memory_space<vmem>>, vector<128x128xbf16>
    %cst_16 = arith.constant dense<0.000000e+00> : vector<32x128xf32>
    %17 = tpu.matmul %15, %16, %cst_16 {dimension_numbers = #tpu.dot_dimension_numbers<[1], [0], [0], [1], [0, 0, 1, 1], [], []>} : vector<32x128xbf16>, vector<128x128xbf16>, vector<32x128xf32> -> vector<32x128xf32>
    %c0_17 = arith.constant 0 : index
    %c0_18 = arith.constant 0 : index
    %18 = vector.load %arg4[%c0_17, %c0_18] : memref<1x128xf32, #tpu.memory_space<vmem>>, vector<1x128xf32>
    %19 = vector.broadcast %18 : vector<1x128xf32> to vector<32x128xf32>
    %20 = arith.addf %17, %19 : vector<32x128xf32>
    %c0_19 = arith.constant 0 : index
    %c0_20 = arith.constant 0 : index
    %c0_21 = arith.constant 0 : index
    %21 = vector.load %arg5[%c0_19, %c0_20, %c0_21] : memref<1x32x128xf32, #tpu.memory_space<vmem>>, vector<1x32x128xf32>
    %22 = vector.shape_cast %21 : vector<1x32x128xf32> to vector<32x128xf32>
    %23 = vector.shape_cast %20 : vector<32x128xf32> to vector<1x32x128xf32>
    tpu.vector_store %arg5[%c0_19, %c0_20, %c0_21], %23 {strides = array<i32>} : memref<1x32x128xf32, #tpu.memory_space<vmem>>, vector<1x32x128xf32>,
    return
  }
  func.func @transform_0(%arg0: i32) -> (i32, i32, i32, i32) {
    %c0_i32 = arith.constant 0 : i32
    %c0_i32_0 = arith.constant 0 : i32
    %c0_i32_1 = arith.constant 0 : i32
    %c0_i32_2 = arith.constant 0 : i32
    return %arg0, %c0_i32, %c0_i32_0, %c0_i32_1 : i32, i32, i32, i32
  }
  func.func @transform_1(%arg0: i32) -> (i32, i32) {
    %c0_i32 = arith.constant 0 : i32
    %c0_i32_0 = arith.constant 0 : i32
    %c0_i32_1 = arith.constant 0 : i32
    return %c0_i32, %c0_i32_0 : i32, i32
  }
  func.func @transform_2(%arg0: i32) -> (i32, i32) {
    %c0_i32 = arith.constant 0 : i32
    %c0_i32_0 = arith.constant 0 : i32
    %c0_i32_1 = arith.constant 0 : i32
    return %c0_i32, %c0_i32_0 : i32, i32
  }
  func.func @transform_3(%arg0: i32) -> (i32, i32) {
    %c0_i32 = arith.constant 0 : i32
    %c0_i32_0 = arith.constant 0 : i32
    %c0_i32_1 = arith.constant 0 : i32
    return %c0_i32, %c0_i32_0 : i32, i32
  }
  func.func @transform_4(%arg0: i32) -> (i32, i32, i32) {
    %c0_i32 = arith.constant 0 : i32
    %c0_i32_0 = arith.constant 0 : i32
    %c0_i32_1 = arith.constant 0 : i32
    return %arg0, %c0_i32, %c0_i32_0 : i32, i32, i32
  }
}

</mosaic_0001>

<llo_original>
// kernel: tpu_custom_call.1
$region0: #{tpu_custom_call.1}
  #allocation0 [shape = 'u32[]', space=smem, size = 0x4, offset = 0x4, fixed_abs, tag = 'smem constant byte address 0x4 - core index']
  #allocation1 [shape = 'u32[144,128]{1,0:T(1,128)}', space=vmem, size = 0x12000, scoped, tag = 'internal scratch']
  %s0 = inlined_call_operand.hbm [shape: f32[2,4,16,16], index: 0, kind: input, shape index: {}]
  %s1 = inlined_call_operand.vmem [shape: bf16[64,16], index: 1, kind: input, shape index: {}]
  %s2 = inlined_call_operand.hbm [shape: bf16[128,128], index: 2, kind: input, shape index: {}]
  %s3 = inlined_call_operand.vmem [shape: f32[1,128], index: 3, kind: input, shape index: {}]
  %s4 = inlined_call_operand.hbm [shape: f32[2,32,128], index: 4, kind: output, shape index: {}]
  %s5 = sld [smem:[#allocation0]]
  $region57: #{tpu_custom_call.1} parent=0
    _
  %s7 = ssub.s32 1, %s5
  %s8 = scalar_select 0, %s7, %s5
  $region1: #{tpu_custom_call.1} parent=0
    #allocation2 [shape = 'u8[65536]{0}', space=vmem, size = 0x10000, scoped, tag = 'input window, operand 0']
    #allocation3 [shape = 's32[2]{0}', space=sflag, size = 0x8, scoped, tag = 'scoped memory for tpu_custom_call.1']
    #allocation4 [shape = 's32[2]{0}', space=sflag, size = 0x8, scoped, tag = 'scoped memory for tpu_custom_call.1']
    #allocation5 [shape = 'u8[32768]{0}', space=vmem, size = 0x8000, scoped, tag = 'input window, operand 2, single buffered']
    #allocation6 [shape = 's32[1]{0}', space=sflag, size = 0x4, scoped, tag = 'scoped memory for tpu_custom_call.1']
    #allocation7 [shape = 'u8[32768]{0}', space=vmem, size = 0x8000, scoped, tag = 'output window, operand 0']
    %9 = vsyncpa [#allocation3], 0
    %s10 = scalar_lea.sflag [#allocation3], 1
    %11 = vsyncpa %s10, 0
    %12 = vsyncpa [#allocation6], 0
    %13 = vsyncpa [#allocation4], 0
    %s14 = scalar_lea.sflag [#allocation4], 1
    %15 = vsyncpa %s14, 0
    loop: start=0, step=1, limit=4
    $region2: #{tpu_custom_call.1} parent=1 // loop_pre_header
      _
    $region3: #{tpu_custom_call.1} parent=1 // loop_header
      %s17 = sphi 0, %s21
      %p18 = scmp.ge.s32.totalorder %s17, 4
      %s27 = sphi 0, %s29
      %s30 = sphi 0, %s27
      %s31 = sphi 0, %s30
      %s47 = sphi 0, %s31
      %s51 = sphi 0, %s51
      %s53 = sphi 0, %s51
      %s54 = sphi 0, %s53
      %s68 = sphi 0, %s54
      %s72 = sphi 0, %s72
      %s74 = sphi 0, %s72
      %s75 = sphi 0, %s74
      %s89 = sphi 0, %s75
      %s93 = sphi 0, %s93
      %s95 = sphi 0, %s93
      %s96 = sphi 0, %s95
      %s110 = sphi 0, %s96
      %s116 = sphi 0, %s118
      %s119 = sphi 0, %s116
      %s120 = sphi 0, %s119
      %s136 = sphi 0, %s120
    $region4: #{tpu_custom_call.1} parent=1 // loop_header_branch
      %20 = sbr.rel (%p18) target = $region8
    $region5: #{tpu_custom_call.1} parent=1 // loop_body
      %s22 = ssub.s32 %s17, 1
      %s23 = ssub.s32 %s17, 2
      %s24 = sadd.s32 %s17, 1
      %s25 = ssub.s32 %s17, %s24
      %p26 = scmp.eq.s32.totalorder %s25, 0
      %s28 = sadd.s32 %s27, 1
      %s29 = scalar_select %p26, %s27, %s28
      %p32 = pneg %p26
      %p33 = scmp.eq.s32.totalorder %s17, 1
      %p34 = por %p32, %p33
      %p35 = scmp.ne.s32.totalorder %s27, %s30
      %p36 = scmp.eq.s32.totalorder %s17, 0
      %p37 = por %p35, %p36
      %p38 = scmp.ne.s32.totalorder %s27, %s30
      %p39 = scmp.eq.s32.totalorder %s22, 1
      %p40 = por %p38, %p39
      %p41 = scmp.ne.s32.totalorder %s30, %s31
      %p42 = scmp.eq.s32.totalorder %s22, 0
      %p43 = por %p41, %p42
      %p44 = scmp.ne.s32.totalorder %s30, %s31
      %p45 = scmp.eq.s32.totalorder %s23, 1
      %p46 = por %p44, %p45
      %p48 = scmp.ne.s32.totalorder %s31, %s47
      %p49 = scmp.eq.s32.totalorder %s23, 0
      %p50 = por %p48, %p49
      %s52 = sadd.s32 %s51, 1
      %p55 = scmp.eq.s32.totalorder %s17, 1
      %p56 = scmp.ne.s32.totalorder %s51, %s53
      %p57 = scmp.eq.s32.totalorder %s17, 0
      %p58 = por %p56, %p57
      %p59 = scmp.ne.s32.totalorder %s51, %s53
      %p60 = scmp.eq.s32.totalorder %s22, 1
      %p61 = por %p59, %p60
      %p62 = scmp.ne.s32.totalorder %s53, %s54
      %p63 = scmp.eq.s32.totalorder %s22, 0
      %p64 = por %p62, %p63
      %p65 = scmp.ne.s32.totalorder %s53, %s54
      %p66 = scmp.eq.s32.totalorder %s23, 1
      %p67 = por %p65, %p66
      %p69 = scmp.ne.s32.totalorder %s54, %s68
      %p70 = scmp.eq.s32.totalorder %s23, 0
      %p71 = por %p69, %p70
      %s73 = sadd.s32 %s72, 1
      %p76 = scmp.eq.s32.totalorder %s17, 1
      %p77 = scmp.ne.s32.totalorder %s72, %s74
      %p78 = scmp.eq.s32.totalorder %s17, 0
      %p79 = por %p77, %p78
      %p80 = scmp.ne.s32.totalorder %s72, %s74
      %p81 = scmp.eq.s32.totalorder %s22, 1
      %p82 = por %p80, %p81
      %p83 = scmp.ne.s32.totalorder %s74, %s75
      %p84 = scmp.eq.s32.totalorder %s22, 0
      %p85 = por %p83, %p84
      %p86 = scmp.ne.s32.totalorder %s74, %s75
      %p87 = scmp.eq.s32.totalorder %s23, 1
      %p88 = por %p86, %p87
      %p90 = scmp.ne.s32.totalorder %s75, %s89
      %p91 = scmp.eq.s32.totalorder %s23, 0
      %p92 = por %p90, %p91
      %s94 = sadd.s32 %s93, 1
      %p97 = scmp.eq.s32.totalorder %s17, 1
      %p98 = scmp.ne.s32.totalorder %s93, %s95
      %p99 = scmp.eq.s32.totalorder %s17, 0
      %p100 = por %p98, %p99
      %p101 = scmp.ne.s32.totalorder %s93, %s95
      %p102 = scmp.eq.s32.totalorder %s22, 1
      %p103 = por %p101, %p102
      %p104 = scmp.ne.s32.totalorder %s95, %s96
      %p105 = scmp.eq.s32.totalorder %s22, 0
      %p106 = por %p104, %p105
      %p107 = scmp.ne.s32.totalorder %s95, %s96
      %p108 = scmp.eq.s32.totalorder %s23, 1
      %p109 = por %p107, %p108
      %p111 = scmp.ne.s32.totalorder %s96, %s110
      %p112 = scmp.eq.s32.totalorder %s23, 0
      %p113 = por %p111, %p112
      %s114 = ssub.s32 %s17, %s24
      %p115 = scmp.eq.s32.totalorder %s114, 0
      %s117 = sadd.s32 %s116, 1
      %s118 = scalar_select %p115, %s116, %s117
      %p121 = pneg %p115
      %p122 = scmp.eq.s32.totalorder %s17, 1
      %p123 = por %p121, %p122
      %p124 = scmp.ne.s32.totalorder %s116, %s119
      %p125 = scmp.eq.s32.totalorder %s17, 0
      %p126 = por %p124, %p125
      %p127 = scmp.ne.s32.totalorder %s116, %s119
      %p128 = scmp.eq.s32.totalorder %s22, 1
      %p129 = por %p127, %p128
      %p130 = scmp.ne.s32.totalorder %s119, %s120
      %p131 = scmp.eq.s32.totalorder %s22, 0
      %p132 = por %p130, %p131
      %p133 = scmp.ne.s32.totalorder %s119, %s120
      %p134 = scmp.eq.s32.totalorder %s23, 1
      %p135 = por %p133, %p134
      %p137 = scmp.ne.s32.totalorder %s120, %s136
      %p138 = scmp.eq.s32.totalorder %s23, 0
      %p139 = por %p137, %p138
      %p140 = scmp.le.s32.totalorder 1, %s17
      %p141 = scmp.lt.s32.totalorder %s17, 3
      %p142 = pnand %p140, %p141
      %p143 = pneg %p142
      // Predicated region
      $region9: #{tpu_custom_call.1} parent=5 // pred_check
        _
      $region10: #{tpu_custom_call.1} parent=5 // pred_check_branch
        %145 = sbr.rel (%p142) target = $region12
      $region11: #{tpu_custom_call.1} parent=5 // pred_region
        %s146 = ssub.s32 %s17, 1
        // Predicated region
        $region13: #{tpu_custom_call.1} parent=11 // pred_check
          %p147 = pneg %p64
        $region14: #{tpu_custom_call.1} parent=11 // pred_check_branch
          %149 = sbr.rel (%p147) target = $region16
        $region15: #{tpu_custom_call.1} parent=11 // pred_region
          _
        $region16: #{tpu_custom_call.1} parent=11 // pred_fallthru
          _
        // Predicated region
        $region17: #{tpu_custom_call.1} parent=11 // pred_check
          %p150 = pneg %p85
        $region18: #{tpu_custom_call.1} parent=11 // pred_check_branch
          %152 = sbr.rel (%p150) target = $region20
        $region19: #{tpu_custom_call.1} parent=11 // pred_region
          %s154 = ssub.s32 1024, 1024
          %155 = vsyncadd [#allocation6], %s154
          %s156 = sshll.u32 [#allocation5], 4
          %s157 = int_to_ptr.vmem [resolvable:$true] %s156
          %162 = dma.hbm_to_vmem [thread:$0]  %s2, 1024, %s157, [#allocation6], 64, 64, 4
        $region20: #{tpu_custom_call.1} parent=11 // pred_fallthru
          _
        // Predicated region
        $region21: #{tpu_custom_call.1} parent=11 // pred_check
          %p163 = pneg %p106
        $region22: #{tpu_custom_call.1} parent=11 // pred_check_branch
          %165 = sbr.rel (%p163) target = $region24
        $region23: #{tpu_custom_call.1} parent=11 // pred_region
          _
        $region24: #{tpu_custom_call.1} parent=11 // pred_fallthru
          _
      $region12: #{tpu_custom_call.1} parent=5 // pred_fallthru
        _
      %p166 = scmp.lt.s32.totalorder %s17, 2
      // Predicated region
      $region25: #{tpu_custom_call.1} parent=5 // pred_check
        %p167 = pneg %p166
      $region26: #{tpu_custom_call.1} parent=5 // pred_check_branch
        %169 = sbr.rel (%p167) target = $region28
      $region27: #{tpu_custom_call.1} parent=5 // pred_region
        // Predicated region
        $region29: #{tpu_custom_call.1} parent=27 // pred_check
          %p170 = pneg %p37
        $region30: #{tpu_custom_call.1} parent=27 // pred_check_branch
          %172 = sbr.rel (%p170) target = $region32
        $region31: #{tpu_custom_call.1} parent=27 // pred_region
          %s173 = sand.u32 %s27, 1
          %s174 = scalar_lea.sflag [#allocation3], %s173
          %s175 = sand.u32 %s27, 1
          %s176 = smul.addr %s175, 64
          %s177 = scalar_lea.vmem [#allocation2], %s176
          %s179 = ssub.s32 1024, 1024
          %180 = vsyncadd %s174, %s179
          %s181 = smul.addr %s17, 8
          %s182 = smul.addr %s181, 128
          %s183 = scalar_lea.hbm %s0, %s182
          %s184 = sshll.u32 %s177, 4
          %s185 = int_to_ptr.vmem [resolvable:$true] %s184
          %190 = dma.hbm_to_vmem [thread:$0]  %s183, 1024, %s185, %s174, 128, 128, 8
        $region32: #{tpu_custom_call.1} parent=27 // pred_fallthru
          _
      $region28: #{tpu_custom_call.1} parent=5 // pred_fallthru
        _
      %p191 = scmp.le.s32.totalorder 1, %s17
      %p192 = scmp.lt.s32.totalorder %s17, 3
      %p193 = pnand %p191, %p192
      %p194 = pneg %p193
      // Predicated region
      $region33: #{tpu_custom_call.1} parent=5 // pred_check
        _
      $region34: #{tpu_custom_call.1} parent=5 // pred_check_branch
        %196 = sbr.rel (%p193) target = $region36
      $region35: #{tpu_custom_call.1} parent=5 // pred_region
        %s197 = ssub.s32 %s17, 1
        %s198 = sand.u32 %s30, 1
        %s199 = scalar_lea.sflag [#allocation3], %s198
        %s200 = sand.u32 %s30, 1
        %s201 = smul.addr %s200, 64
        %s202 = scalar_lea.vmem [#allocation2], %s201
        // Predicated region
        $region37: #{tpu_custom_call.1} parent=35 // pred_check
          %p203 = pneg %p43
        $region38: #{tpu_custom_call.1} parent=35 // pred_check_branch
          %205 = sbr.rel (%p203) target = $region40
        $region39: #{tpu_custom_call.1} parent=35 // pred_region
          %206 = dma.done %s199, 1024
        $region40: #{tpu_custom_call.1} parent=35 // pred_fallthru
          _
        // Predicated region
        $region41: #{tpu_custom_call.1} parent=35 // pred_check
          %p207 = pneg %p85
        $region42: #{tpu_custom_call.1} parent=35 // pred_check_branch
          %209 = sbr.rel (%p207) target = $region44
        $region43: #{tpu_custom_call.1} parent=35 // pred_region
          %210 = dma.done [#allocation6], 1024
        $region44: #{tpu_custom_call.1} parent=35 // pred_fallthru
          _
        %s211 = sand.u32 %s30, 1
        %s212 = scalar_lea.sflag [#allocation3], %s211
        %s213 = sand.u32 %s30, 1
        %s214 = smul.addr %s213, 64
        %s215 = scalar_lea.vmem [#allocation2], %s214
        %p216 = pneg %p43
        %p217 = pneg %p40
        %p218 = pneg %p64
        %p219 = pneg %p61
        %p220 = pneg %p85
        %p221 = pneg %p82
        %p222 = pneg %p106
        %p223 = pneg %p103
        %p224 = pneg %p132
        %p225 = pneg %p129
        %s226 = sand.u32 %s119, 1
        %s227 = scalar_lea.sflag [#allocation4], %s226
        %s228 = sand.u32 %s119, 1
        %s229 = smul.addr %s228, 32
        %s230 = scalar_lea.vmem [#allocation7], %s229
        %v232 = vld [vmem:[%s1] sm:$0xf]
        %v233 = vld [vmem:[%s1 + $0x4] sm:$0xf]
        %v234 = vld [vmem:[%s1 + $0x8] sm:$0xf]
        %v235 = vld [vmem:[%s1 + $0xc] sm:$0xf]
        %v236 = vld [vmem:[%s1 + $0x10] sm:$0xf]
        %v237 = vld [vmem:[%s1 + $0x14] sm:$0xf]
        %v238 = vld [vmem:[%s1 + $0x18] sm:$0xf]
        %v239 = vld [vmem:[%s1 + $0x1c] sm:$0xf]
        %v240 = vld [vmem:[%s202] sm:$0xff]
        %v241 = vld [vmem:[%s202 + $0x8] sm:$0xff]
        %s242 = scalar_lea.vmem %s202, 16 [#allocation2]
        %v243 = vld [vmem:[%s242] sm:$0xff]
        %v244 = vld [vmem:[%s242 + $0x8] sm:$0xff]
        %s245 = scalar_lea.vmem %s202, 32 [#allocation2]
        %v246 = vld [vmem:[%s245] sm:$0xff]
        %v247 = vld [vmem:[%s245 + $0x8] sm:$0xff]
        %s248 = scalar_lea.vmem %s202, 48 [#allocation2]
        %v249 = vld [vmem:[%s248] sm:$0xff]
        %v250 = vld [vmem:[%s248 + $0x8] sm:$0xff]
        %253 = vrot.lane.b32.xlu0 %v243, 16
        %v254 = vpop.permute.xlu0 %253
        %255 = vrot.lane.b32.xlu0 %v244, 16
        %v256 = vpop.permute.xlu0 %255
        %261 = vrot.lane.b32.xlu0 %v246, 32
        %v262 = vpop.permute.xlu0 %261
        %263 = vrot.lane.b32.xlu0 %v247, 32
        %v264 = vpop.permute.xlu0 %263
        %269 = vrot.lane.b32.xlu0 %v249, 48
        %v270 = vpop.permute.xlu0 %269
        %271 = vrot.lane.b32.xlu0 %v250, 48
        %v272 = vpop.permute.xlu0 %271
        %vm275 = vcmask 130048
        %v276 = vsel %vm275, %v240, %v254
        %v277 = vsel %vm275, %v241, %v256
        %vm278 = vcmask 261120
        %v279 = vsel %vm278, %v276, %v262
        %v280 = vsel %vm278, %v277, %v264
        %vm281 = vcmask 392192
        %v282 = vsel %vm281, %v279, %v270
        %v283 = vsel %vm281, %v280, %v272
        %v284 = vpack.c.bf16 %v283, %v282
        %v293 = vunpack.c.l.b16 %v232
        %v294 = vunpack.c.l.b16 %v233
        %v295 = vunpack.c.l.b16 %v234
        %v296 = vunpack.c.l.b16 %v235
        %v297 = vunpack.c.l.b16 %v236
        %v298 = vunpack.c.l.b16 %v237
        %v299 = vunpack.c.l.b16 %v238
        %v300 = vunpack.c.l.b16 %v239
        %v301 = vpack.c.b16 %v294, %v293
        %v302 = vpack.c.b16 %v296, %v295
        %v303 = vpack.c.b16 %v298, %v297
        %v304 = vpack.c.b16 %v300, %v299
        %v306 = vsel %vm275, %v301, 0
        %v309 = vsel %vm275, %v302, 0
        %v312 = vsel %vm275, %v303, 0
        %v315 = vsel %vm275, %v304, 0
        %317 = vmatprep.subr.bf16.mxu0 0
        %318 = vmatpush1.bf16.msra.mxu0 0
        %319 = vmatprep.subr.bf16.mxu0 0
        %320 = vmatpush1.bf16.msra.mxu0 0
        %321 = vmatprep.subr.bf16.mxu0 0
        %322 = vmatpush1.bf16.msra.mxu0 0
        %323 = vmatprep.subr.bf16.mxu0 0
        %324 = vmatpush1.bf16.msra.mxu0 0
        %325 = vmatprep.subr.bf16.mxu0 0
        %326 = vmatpush1.bf16.msra.mxu0 0
        %327 = vmatprep.subr.bf16.mxu0 0
        %328 = vmatpush1.bf16.msra.mxu0 0
        %329 = vmatprep.subr.bf16.mxu0 0
        %330 = vmatpush1.bf16.msra.mxu0 0
        %331 = vmatprep.subr.bf16.mxu0 0
        %332 = vmatpush1.bf16.msra.mxu0 %v284
        %333 = vmatprep.subr.bf16.mxu0 0
        %334 = vmatpush2.bf16.msra.mxu0 0
        %335 = vmatprep.subr.bf16.mxu0 0
        %336 = vmatpush2.bf16.msra.mxu0 0
        %337 = vmatprep.subr.bf16.mxu0 0
        %338 = vmatpush2.bf16.msra.mxu0 0
        %339 = vmatprep.subr.bf16.mxu0 0
        %340 = vmatpush2.bf16.msra.mxu0 0
        %341 = vmatprep.subr.bf16.mxu0 0
        %342 = vmatpush2.bf16.msra.mxu0 0
        %343 = vmatprep.subr.bf16.mxu0 0
        %344 = vmatpush2.bf16.msra.mxu0 0
        %345 = vmatprep.subr.bf16.mxu0 0
        %346 = vmatpush2.bf16.msra.mxu0 0
        %347 = vmatprep.subr.bf16.mxu0 0
        %348 = vmatpush2.bf16.msra.mxu0 0
        %349 = vmatprep.mubr.bf16.mxu0 0
        %350 = vmatmul.mubr.bf16.gmra.mxu0 %v306
        %v351 = vpop.f32.mrf.mxu0
        %v352 = vadd.f32 0.0, %v351
        %v353 = vpop.f32.mrf.mxu0
        %v354 = vpop.f32.mrf.mxu0
        %v355 = vadd.f32 0.0, %v354
        %v356 = vpop.f32.mrf.mxu0
        %357 = vmatprep.mubr.bf16.mxu0 0
        %358 = vmatmul.mubr.bf16.gmra.mxu0 %v309
        %v359 = vpop.f32.mrf.mxu0
        %v360 = vadd.f32 0.0, %v359
        %v361 = vpop.f32.mrf.mxu0
        %v362 = vpop.f32.mrf.mxu0
        %v363 = vadd.f32 0.0, %v362
        %v364 = vpop.f32.mrf.mxu0
        %365 = vmatprep.mubr.bf16.mxu0 0
        %366 = vmatmul.mubr.bf16.gmra.mxu0 %v312
        %v367 = vpop.f32.mrf.mxu0
        %v368 = vadd.f32 0.0, %v367
        %v369 = vpop.f32.mrf.mxu0
        %v370 = vpop.f32.mrf.mxu0
        %v371 = vadd.f32 0.0, %v370
        %v372 = vpop.f32.mrf.mxu0
        %373 = vmatprep.mubr.bf16.mxu0 0
        %374 = vmatmul.mubr.bf16.gmra.mxu0 %v315
        %v375 = vpop.f32.mrf.mxu0
        %v376 = vadd.f32 0.0, %v375
        %v377 = vpop.f32.mrf.mxu0
        %v378 = vpop.f32.mrf.mxu0
        %v379 = vadd.f32 0.0, %v378
        %v380 = vpop.f32.mrf.mxu0
        %381 = vdwg.mxu0
        %386 = vrot.lane.b32.xlu0 %v368, 64
        %v387 = vpop.permute.xlu0 %386
        %388 = vrot.lane.b32.xlu0 %v371, 64
        %v389 = vpop.permute.xlu0 %388
        %390 = vrot.lane.b32.xlu0 %v376, 64
        %v391 = vpop.permute.xlu0 %390
        %392 = vrot.lane.b32.xlu0 %v379, 64
        %v393 = vpop.permute.xlu0 %392
        %vm398 = vcmask 523264
        %v399 = vsel %vm398, %v352, %v387
        %v400 = vsel %vm398, %v355, %v389
        %v401 = vsel %vm398, %v360, %v391
        %v402 = vsel %vm398, %v363, %v393
        %v403 = vpack.c.bf16 %v400, %v399
        %v404 = vpack.c.bf16 %v402, %v401
        %v405 = vld [vmem:[#allocation5] sm:$0xf]
        %v406 = vld [vmem:[#allocation5 + $0x4] sm:$0xf]
        %v407 = vld [vmem:[#allocation5 + $0x8] sm:$0xf]
        %v408 = vld [vmem:[#allocation5 + $0xc] sm:$0xf]
        %v409 = vld [vmem:[#allocation5 + $0x10] sm:$0xf]
        %v410 = vld [vmem:[#allocation5 + $0x14] sm:$0xf]
        %v411 = vld [vmem:[#allocation5 + $0x18] sm:$0xf]
        %v412 = vld [vmem:[#allocation5 + $0x1c] sm:$0xf]
        %v413 = vld [vmem:[#allocation5 + $0x20] sm:$0xf]
        %v414 = vld [vmem:[#allocation5 + $0x24] sm:$0xf]
        %v415 = vld [vmem:[#allocation5 + $0x28] sm:$0xf]
        %v416 = vld [vmem:[#allocation5 + $0x2c] sm:$0xf]
        %v417 = vld [vmem:[#allocation5 + $0x30] sm:$0xf]
        %v418 = vld [vmem:[#allocation5 + $0x34] sm:$0xf]
        %v419 = vld [vmem:[#allocation5 + $0x38] sm:$0xf]
        %v420 = vld [vmem:[#allocation5 + $0x3c] sm:$0xf]
        %v421 = vld [vmem:[%s3] sm:$0x1]
        %v423 = vlaneseq
        %v424 = vshrl.u32 %v423, 7
        %v425 = vsub.s32 0, %v424
        %v426 = vrot.slane %v421, %v425
        %v444 = vunpack.c.l.b16 %v405
        %v445 = vunpack.c.l.b16 %v406
        %v446 = vunpack.c.l.b16 %v407
        %v447 = vunpack.c.l.b16 %v408
        %v448 = vunpack.c.l.b16 %v409
        %v449 = vunpack.c.l.b16 %v410
        %v450 = vunpack.c.l.b16 %v411
        %v451 = vunpack.c.l.b16 %v412
        %v452 = vunpack.c.l.b16 %v413
        %v453 = vunpack.c.l.b16 %v414
        %v454 = vunpack.c.l.b16 %v415
        %v455 = vunpack.c.l.b16 %v416
        %v456 = vunpack.c.l.b16 %v417
        %v457 = vunpack.c.l.b16 %v418
        %v458 = vunpack.c.l.b16 %v419
        %v459 = vunpack.c.l.b16 %v420
        %v460 = vpack.c.b16 %v445, %v444
        %v461 = vpack.c.b16 %v447, %v446
        %v462 = vpack.c.b16 %v449, %v448
        %v463 = vpack.c.b16 %v451, %v450
        %v464 = vpack.c.b16 %v453, %v452
        %v465 = vpack.c.b16 %v455, %v454
        %v466 = vpack.c.b16 %v457, %v456
        %v467 = vpack.c.b16 %v459, %v458
        %476 = vmatprep.subr.bf16.mxu0 0
        %477 = vmatpush1.bf16.msra.mxu0 %v467
        %478 = vmatprep.subr.bf16.mxu0 0
        %479 = vmatpush1.bf16.msra.mxu0 %v466
        %480 = vmatprep.subr.bf16.mxu0 0
        %481 = vmatpush1.bf16.msra.mxu0 %v465
        %482 = vmatprep.subr.bf16.mxu0 0
        %483 = vmatpush1.bf16.msra.mxu0 %v464
        %484 = vmatprep.subr.bf16.mxu0 0
        %485 = vmatpush1.bf16.msra.mxu0 %v463
        %486 = vmatprep.subr.bf16.mxu0 0
        %487 = vmatpush1.bf16.msra.mxu0 %v462
        %488 = vmatprep.subr.bf16.mxu0 0
        %489 = vmatpush1.bf16.msra.mxu0 %v461
        %490 = vmatprep.subr.bf16.mxu0 0
        %491 = vmatpush1.bf16.msra.mxu0 %v460
        %492 = vmatprep.subr.bf16.mxu0 0
        %493 = vmatpush2.bf16.msra.mxu0 0
        %494 = vmatprep.subr.bf16.mxu0 0
        %495 = vmatpush2.bf16.msra.mxu0 0
        %496 = vmatprep.subr.bf16.mxu0 0
        %497 = vmatpush2.bf16.msra.mxu0 0
        %498 = vmatprep.subr.bf16.mxu0 0
        %499 = vmatpush2.bf16.msra.mxu0 0
        %500 = vmatprep.subr.bf16.mxu0 0
        %501 = vmatpush2.bf16.msra.mxu0 0
        %502 = vmatprep.subr.bf16.mxu0 0
        %503 = vmatpush2.bf16.msra.mxu0 0
        %504 = vmatprep.subr.bf16.mxu0 0
        %505 = vmatpush2.bf16.msra.mxu0 0
        %506 = vmatprep.subr.bf16.mxu0 0
        %507 = vmatpush2.bf16.msra.mxu0 0
        %508 = vmatprep.mubr.bf16.mxu0 0
        %509 = vmatmul.mubr.bf16.gmra.mxu0 %v403
        %v510 = vpop.f32.mrf.mxu0
        %v511 = vadd.f32 %v426, %v510
        %v512 = vpop.f32.mrf.mxu0
        %v513 = vpop.f32.mrf.mxu0
        %v514 = vadd.f32 %v426, %v513
        %v515 = vpop.f32.mrf.mxu0
        %516 = vmatprep.mubr.bf16.mxu0 0
        %517 = vmatmul.mubr.bf16.gmra.mxu0 %v404
        %v518 = vpop.f32.mrf.mxu0
        %v519 = vadd.f32 %v426, %v518
        %v520 = vpop.f32.mrf.mxu0
        %v521 = vpop.f32.mrf.mxu0
        %v522 = vadd.f32 %v426, %v521
        %v523 = vpop.f32.mrf.mxu0
        %524 = vdwg.mxu0
        %525 = vst [vmem:[%s230] sm:$0xff] %v511
        %526 = vst [vmem:[%s230 + $0x8] sm:$0xff] %v514
        %527 = vst [vmem:[%s230 + $0x10] sm:$0xff] %v519
        %528 = vst [vmem:[%s230 + $0x18] sm:$0xff] %v522
        %s529 = sand.u32 %s119, 1
        %s530 = scalar_lea.sflag [#allocation4], %s529
        %s531 = sand.u32 %s119, 1
        %s532 = smul.addr %s531, 32
        %s533 = scalar_lea.vmem [#allocation7], %s532
        // Predicated region
        $region45: #{tpu_custom_call.1} parent=35 // pred_check
          %p534 = pneg %p129
        $region46: #{tpu_custom_call.1} parent=35 // pred_check_branch
          %536 = sbr.rel (%p534) target = $region48
        $region47: #{tpu_custom_call.1} parent=35 // pred_region
          %s538 = ssub.s32 512, 512
          %539 = vsyncadd %s530, %s538
          %s540 = smul.addr %s22, 4
          %s541 = smul.addr %s540, 128
          %s542 = scalar_lea.hbm %s4, %s541
          %s543 = sshll.u32 %s533, 4
          %s544 = int_to_ptr.vmem [resolvable:$true] %s543
          %549 = dma.vmem_to_hbm [thread:$0]  %s544, 512, %s542, %s530, 128, 128, 8
        $region48: #{tpu_custom_call.1} parent=35 // pred_fallthru
          _
      $region36: #{tpu_custom_call.1} parent=5 // pred_fallthru
        _
      %p550 = scmp.le.s32.totalorder 2, %s17
      // Predicated region
      $region49: #{tpu_custom_call.1} parent=5 // pred_check
        %p551 = pneg %p550
      $region50: #{tpu_custom_call.1} parent=5 // pred_check_branch
        %553 = sbr.rel (%p551) target = $region52
      $region51: #{tpu_custom_call.1} parent=5 // pred_region
        %s554 = ssub.s32 %s17, 2
        // Predicated region
        $region53: #{tpu_custom_call.1} parent=51 // pred_check
          %p555 = pneg %p135
        $region54: #{tpu_custom_call.1} parent=51 // pred_check_branch
          %557 = sbr.rel (%p555) target = $region56
        $region55: #{tpu_custom_call.1} parent=51 // pred_region
          %s558 = sand.u32 %s120, 1
          %s559 = scalar_lea.sflag [#allocation4], %s558
          %s560 = sand.u32 %s120, 1
          %s561 = smul.addr %s560, 32
          %s562 = scalar_lea.vmem [#allocation7], %s561
          %563 = dma.done %s559, 512
        $region56: #{tpu_custom_call.1} parent=51 // pred_fallthru
          _
      $region52: #{tpu_custom_call.1} parent=5 // pred_fallthru
        _
    $region6: #{tpu_custom_call.1} parent=1 // loop_footer
      %s21 = sadd.s32 1, %s17
    $region7: #{tpu_custom_call.1} parent=1 // loop_footer_branch
      %16 = sbr.rel target = $region3
    $region8: #{tpu_custom_call.1} parent=1 // loop_exit
      _
    %564 = vsyncpa [#allocation3], 1
    %s565 = scalar_lea.sflag [#allocation3], 1
    %566 = vsyncpa %s565, 1
    %567 = vsyncpa [#allocation6], 1
    %568 = vsyncpa [#allocation4], 1
    %s569 = scalar_lea.sflag [#allocation4], 1
    %570 = vsyncpa %s569, 1

</llo_original>
